<compile_context>
chip_gen: v5e
topology: v5e:2x2
jax: 0.10.0
libtpu: 0.0.40
codegen_flags: <defaults>
</compile_context>

<pallas_src>
import jax
import jax.numpy as jnp
from jax.experimental import pallas as pl
from jax.experimental.pallas import tpu as pltpu

LANE = 128      # TPU vreg lane width
SUBLANE = 8     # f32 sublane granularity


def _round_up(x, m):
    return ((x + m - 1) // m) * m


def _pad_to(a, shape):
    pads = [(0, s - d) for d, s in zip(a.shape, shape)]
    return jnp.pad(a, pads)


def _connect_kernel(x_ref, w1_ref, b1_ref, wh_ref, bh_ref, w6_ref, b6_ref, o_ref):
    """Fused 6-layer MLP on one lane-dense batch tile. All weights live in VMEM."""
    h = x_ref[...].astype(jnp.float32)

    # Layer 1: (tile, in_p) @ (in_p, hid_p)
    h = jnp.maximum(
        jnp.dot(h, w1_ref[...], preferred_element_type=jnp.float32) + b1_ref[...],
        0.0)

    # Layers 2..5: four identical hidden layers, stacked weights, static unroll.
    for k in range(4):
        h = jnp.maximum(
            jnp.dot(h, wh_ref[k], preferred_element_type=jnp.float32) + bh_ref[k],
            0.0)

    # Layer 6: no ReLU.
    o_ref[...] = (
        jnp.dot(h, w6_ref[...], preferred_element_type=jnp.float32) + b6_ref[...]
    ).astype(o_ref.dtype)


def connect_forward(x, params, *, batch_tile=512):
    """x: (B, in_size). params: list of 6 (W, b) with W shaped (fan_in, fan_out)."""
    B, in_size = x.shape
    hidden = params[0][0].shape[1]
    out_size = params[-1][0].shape[1]

    # Lane-dense padded feature sizes.
    in_p = _round_up(in_size, LANE)
    hid_p = _round_up(hidden, LANE)
    out_p = _round_up(out_size, LANE)

    # Effective batch tile: big enough to amortize per-step overhead, but no
    # bigger than the (sublane-rounded) batch itself.  Always a multiple of 8.
    tile = min(_round_up(batch_tile, SUBLANE), _round_up(B, SUBLANE))
    Bp = _round_up(B, tile)
    n_tiles = Bp // tile

    # Pad activations / weights once, outside the kernel (zero padding is exact:
    # padded weight columns are 0 and relu(0) = 0, so padding never leaks).
    xp = _pad_to(x.astype(jnp.float32), (Bp, in_p))

    (w1, b1), (w2, b2), (w3, b3), (w4, b4), (w5, b5), (w6, b6) = params
    w1p = _pad_to(w1, (in_p, hid_p))
    b1p = _pad_to(b1.reshape(1, -1), (1, hid_p))
    whp = jnp.stack([_pad_to(w, (hid_p, hid_p)) for w in (w2, w3, w4, w5)])
    bhp = jnp.stack([_pad_to(b.reshape(1, -1), (1, hid_p)) for b in (b2, b3, b4, b5)])
    w6p = _pad_to(w6, (hid_p, out_p))
    b6p = _pad_to(b6.reshape(1, -1), (1, out_p))

    def full_spec(arr):
        nd = arr.ndim
        return pl.BlockSpec(arr.shape, lambda i, _nd=nd: (0,) * _nd)

    out_padded = pl.pallas_call(
        _connect_kernel,
        out_shape=jax.ShapeDtypeStruct((Bp, out_p), x.dtype),
        grid_spec=pltpu.PrefetchScalarGridSpec(
            num_scalar_prefetch=0,
            grid=(n_tiles,),
            in_specs=[
                pl.BlockSpec((tile, in_p), lambda i: (i, 0)),   # x tile
                full_spec(w1p), full_spec(b1p),                 # layer 1
                full_spec(whp), full_spec(bhp),                 # layers 2-5 (stacked)
                full_spec(w6p), full_spec(b6p),                 # layer 6
            ],
            out_specs=pl.BlockSpec((tile, out_p), lambda i: (i, 0)),
        ),
        # Total VMEM footprint (weights + one double-buffered activation tile)
        # is well under the scoped default on v5e/v6e/v7x, so no vmem_limit needed.
        compiler_params=pltpu.CompilerParams(
            dimension_semantics=("parallel",)),
    )(xp, w1p, b1p, whp, bhp, w6p, b6p)

    # Strip batch + lane padding.
    return out_padded[:B, :out_size]


def init_linear(key, fan_in, fan_out, dtype=jnp.float32):
    """Deterministic init matching torch.nn.Linear's default U(-1/sqrt(fan_in), +)."""
    kw, kb = jax.random.split(key)
    bound = 1.0 / jnp.sqrt(float(fan_in))
    # Stored as (fan_in, fan_out)  ==  PyTorch weight.T
    w = jax.random.uniform(kw, (fan_in, fan_out), dtype, -bound, bound)
    b = jax.random.uniform(kb, (fan_out,), dtype, -bound, bound)
    return w, b


def connect_reference(x, params):
    """Plain-JAX reference of the same forward pass."""
    h = x
    for i, (w, b) in enumerate(params):
        h = h @ w + b
        if i < len(params) - 1:
            h = jnp.maximum(h, 0.0)
    return h


if __name__ == "__main__":
    in_size, hidden_size, out_size = 16, 32, 8
    batch = 8

    key = jax.random.PRNGKey(0)
    keys = jax.random.split(key, 7)

    sizes = [(in_size, hidden_size),
             (hidden_size, hidden_size),
             (hidden_size, hidden_size),
             (hidden_size, hidden_size),
             (hidden_size, hidden_size),
             (hidden_size, out_size)]
    params = [init_linear(keys[i], fi, fo) for i, (fi, fo) in enumerate(sizes)]

    x = jax.random.normal(keys[6], (batch, in_size), dtype=jnp.float32)

    out = connect_forward(x, params)
    out = jax.block_until_ready(out)

    ref = connect_reference(x, params)
    assert out.shape == (batch, out_size)
    assert jnp.allclose(out, ref, atol=1e-5, rtol=1e-5), "mismatch vs reference"

    # Also exercise a larger, non-tile-multiple batch (multi-step grid path).
    xb = jax.random.normal(keys[5], (1000, in_size), dtype=jnp.float32)
    outb = jax.block_until_ready(connect_forward(xb, params, batch_tile=256))
    refb = connect_reference(xb, params)
    assert outb.shape == (1000, out_size)
    assert jnp.allclose(outb, refb, atol=1e-4, rtol=1e-4), "mismatch vs reference (large batch)"

    print("KERNEL_OK")
</pallas_src>

<mosaic_0001>
module attributes {stable_mosaic.version = 11 : i64} {
  func.func @_connect_kernel(%arg0: i32, %arg1: memref<8x128xf32, #tpu.memory_space<vmem>>, %arg2: memref<128x128xf32, #tpu.memory_space<vmem>>, %arg3: memref<1x128xf32, #tpu.memory_space<vmem>>, %arg4: memref<4x128x128xf32, #tpu.memory_space<vmem>>, %arg5: memref<4x1x128xf32, #tpu.memory_space<vmem>>, %arg6: memref<128x128xf32, #tpu.memory_space<vmem>>, %arg7: memref<1x128xf32, #tpu.memory_space<vmem>>, %arg8: memref<8x128xf32, #tpu.memory_space<vmem>>) attributes {dimension_semantics = [#tpu.dimension_semantics<parallel>], iteration_bounds = array<i64: 1>, scalar_prefetch = 0 : i64, scratch_operands = 0 : i64, tpu.core_type = #tpu.core_type<tc>, window_params = [{transform_indices = @transform_0, window_bounds = array<i64: 8, 128>}, {pipeline_mode = #tpu.pipeline_mode<synchronous>, transform_indices = @transform_1, window_bounds = array<i64: 128, 128>}, {pipeline_mode = #tpu.pipeline_mode<synchronous>, transform_indices = @transform_2, window_bounds = array<i64: 1, 128>}, {pipeline_mode = #tpu.pipeline_mode<synchronous>, transform_indices = @transform_3, window_bounds = array<i64: 4, 128, 128>}, {pipeline_mode = #tpu.pipeline_mode<synchronous>, transform_indices = @transform_4, window_bounds = array<i64: 4, 1, 128>}, {pipeline_mode = #tpu.pipeline_mode<synchronous>, transform_indices = @transform_5, window_bounds = array<i64: 128, 128>}, {pipeline_mode = #tpu.pipeline_mode<synchronous>, transform_indices = @transform_6, window_bounds = array<i64: 1, 128>}, {transform_indices = @transform_7, window_bounds = array<i64: 8, 128>}]} {
    %c0 = arith.constant 0 : index
    %c0_0 = arith.constant 0 : index
    %0 = vector.load %arg1[%c0, %c0_0] : memref<8x128xf32, #tpu.memory_space<vmem>>, vector<8x128xf32>
    %c0_1 = arith.constant 0 : index
    %c0_2 = arith.constant 0 : index
    %1 = vector.load %arg2[%c0_1, %c0_2] : memref<128x128xf32, #tpu.memory_space<vmem>>, vector<128x128xf32>
    %cst = arith.constant dense<0.000000e+00> : vector<8x128xf32>
    %2 = tpu.matmul %0, %1, %cst {dimension_numbers = #tpu.dot_dimension_numbers<[1], [0], [0], [1], [0, 0, 1, 1], [], []>} : vector<8x128xf32>, vector<128x128xf32>, vector<8x128xf32> -> vector<8x128xf32>
    %c0_3 = arith.constant 0 : index
    %c0_4 = arith.constant 0 : index
    %3 = vector.load %arg3[%c0_3, %c0_4] : memref<1x128xf32, #tpu.memory_space<vmem>>, vector<1x128xf32>
    %4 = vector.broadcast %3 : vector<1x128xf32> to vector<8x128xf32>
    %5 = arith.addf %2, %4 : vector<8x128xf32>
    %cst_5 = arith.constant 0.000000e+00 : f32
    %6 = vector.broadcast %cst_5 : f32 to vector<8x128xf32>
    %7 = arith.maximumf %5, %6 : vector<8x128xf32>
    %c0_6 = arith.constant 0 : index
    %c0_7 = arith.constant 0 : index
    %c0_8 = arith.constant 0 : index
    %8 = vector.load %arg4[%c0_6, %c0_7, %c0_8] : memref<4x128x128xf32, #tpu.memory_space<vmem>>, vector<1x128x128xf32>
    %9 = vector.shape_cast %8 : vector<1x128x128xf32> to vector<128x128xf32>
    %cst_9 = arith.constant dense<0.000000e+00> : vector<8x128xf32>
    %10 = tpu.matmul %7, %9, %cst_9 {dimension_numbers = #tpu.dot_dimension_numbers<[1], [0], [0], [1], [0, 0, 1, 1], [], []>} : vector<8x128xf32>, vector<128x128xf32>, vector<8x128xf32> -> vector<8x128xf32>
    %c0_10 = arith.constant 0 : index
    %c0_11 = arith.constant 0 : index
    %c0_12 = arith.constant 0 : index
    %11 = vector.load %arg5[%c0_10, %c0_11, %c0_12] : memref<4x1x128xf32, #tpu.memory_space<vmem>>, vector<1x1x128xf32>
    %12 = vector.shape_cast %11 : vector<1x1x128xf32> to vector<1x128xf32>
    %13 = vector.broadcast %12 : vector<1x128xf32> to vector<8x128xf32>
    %14 = arith.addf %10, %13 : vector<8x128xf32>
    %cst_13 = arith.constant 0.000000e+00 : f32
    %15 = vector.broadcast %cst_13 : f32 to vector<8x128xf32>
    %16 = arith.maximumf %14, %15 : vector<8x128xf32>
    %c1 = arith.constant 1 : index
    %c0_14 = arith.constant 0 : index
    %c0_15 = arith.constant 0 : index
    %17 = vector.load %arg4[%c1, %c0_14, %c0_15] : memref<4x128x128xf32, #tpu.memory_space<vmem>>, vector<1x128x128xf32>
    %18 = vector.shape_cast %17 : vector<1x128x128xf32> to vector<128x128xf32>
    %cst_16 = arith.constant dense<0.000000e+00> : vector<8x128xf32>
    %19 = tpu.matmul %16, %18, %cst_16 {dimension_numbers = #tpu.dot_dimension_numbers<[1], [0], [0], [1], [0, 0, 1, 1], [], []>} : vector<8x128xf32>, vector<128x128xf32>, vector<8x128xf32> -> vector<8x128xf32>
    %c1_17 = arith.constant 1 : index
    %c0_18 = arith.constant 0 : index
    %c0_19 = arith.constant 0 : index
    %20 = vector.load %arg5[%c1_17, %c0_18, %c0_19] : memref<4x1x128xf32, #tpu.memory_space<vmem>>, vector<1x1x128xf32>
    %21 = vector.shape_cast %20 : vector<1x1x128xf32> to vector<1x128xf32>
    %22 = vector.broadcast %21 : vector<1x128xf32> to vector<8x128xf32>
    %23 = arith.addf %19, %22 : vector<8x128xf32>
    %cst_20 = arith.constant 0.000000e+00 : f32
    %24 = vector.broadcast %cst_20 : f32 to vector<8x128xf32>
    %25 = arith.maximumf %23, %24 : vector<8x128xf32>
    %c2 = arith.constant 2 : index
    %c0_21 = arith.constant 0 : index
    %c0_22 = arith.constant 0 : index
    %26 = vector.load %arg4[%c2, %c0_21, %c0_22] : memref<4x128x128xf32, #tpu.memory_space<vmem>>, vector<1x128x128xf32>
    %27 = vector.shape_cast %26 : vector<1x128x128xf32> to vector<128x128xf32>
    %cst_23 = arith.constant dense<0.000000e+00> : vector<8x128xf32>
    %28 = tpu.matmul %25, %27, %cst_23 {dimension_numbers = #tpu.dot_dimension_numbers<[1], [0], [0], [1], [0, 0, 1, 1], [], []>} : vector<8x128xf32>, vector<128x128xf32>, vector<8x128xf32> -> vector<8x128xf32>
    %c2_24 = arith.constant 2 : index
    %c0_25 = arith.constant 0 : index
    %c0_26 = arith.constant 0 : index
    %29 = vector.load %arg5[%c2_24, %c0_25, %c0_26] : memref<4x1x128xf32, #tpu.memory_space<vmem>>, vector<1x1x128xf32>
    %30 = vector.shape_cast %29 : vector<1x1x128xf32> to vector<1x128xf32>
    %31 = vector.broadcast %30 : vector<1x128xf32> to vector<8x128xf32>
    %32 = arith.addf %28, %31 : vector<8x128xf32>
    %cst_27 = arith.constant 0.000000e+00 : f32
    %33 = vector.broadcast %cst_27 : f32 to vector<8x128xf32>
    %34 = arith.maximumf %32, %33 : vector<8x128xf32>
    %c3 = arith.constant 3 : index
    %c0_28 = arith.constant 0 : index
    %c0_29 = arith.constant 0 : index
    %35 = vector.load %arg4[%c3, %c0_28, %c0_29] : memref<4x128x128xf32, #tpu.memory_space<vmem>>, vector<1x128x128xf32>
    %36 = vector.shape_cast %35 : vector<1x128x128xf32> to vector<128x128xf32>
    %cst_30 = arith.constant dense<0.000000e+00> : vector<8x128xf32>
    %37 = tpu.matmul %34, %36, %cst_30 {dimension_numbers = #tpu.dot_dimension_numbers<[1], [0], [0], [1], [0, 0, 1, 1], [], []>} : vector<8x128xf32>, vector<128x128xf32>, vector<8x128xf32> -> vector<8x128xf32>
    %c3_31 = arith.constant 3 : index
    %c0_32 = arith.constant 0 : index
    %c0_33 = arith.constant 0 : index
    %38 = vector.load %arg5[%c3_31, %c0_32, %c0_33] : memref<4x1x128xf32, #tpu.memory_space<vmem>>, vector<1x1x128xf32>
    %39 = vector.shape_cast %38 : vector<1x1x128xf32> to vector<1x128xf32>
    %40 = vector.broadcast %39 : vector<1x128xf32> to vector<8x128xf32>
    %41 = arith.addf %37, %40 : vector<8x128xf32>
    %cst_34 = arith.constant 0.000000e+00 : f32
    %42 = vector.broadcast %cst_34 : f32 to vector<8x128xf32>
    %43 = arith.maximumf %41, %42 : vector<8x128xf32>
    %c0_35 = arith.constant 0 : index
    %c0_36 = arith.constant 0 : index
    %44 = vector.load %arg6[%c0_35, %c0_36] : memref<128x128xf32, #tpu.memory_space<vmem>>, vector<128x128xf32>
    %cst_37 = arith.constant dense<0.000000e+00> : vector<8x128xf32>
    %45 = tpu.matmul %43, %44, %cst_37 {dimension_numbers = #tpu.dot_dimension_numbers<[1], [0], [0], [1], [0, 0, 1, 1], [], []>} : vector<8x128xf32>, vector<128x128xf32>, vector<8x128xf32> -> vector<8x128xf32>
    %c0_38 = arith.constant 0 : index
    %c0_39 = arith.constant 0 : index
    %46 = vector.load %arg7[%c0_38, %c0_39] : memref<1x128xf32, #tpu.memory_space<vmem>>, vector<1x128xf32>
    %47 = vector.broadcast %46 : vector<1x128xf32> to vector<8x128xf32>
    %48 = arith.addf %45, %47 : vector<8x128xf32>
    %c0_40 = arith.constant 0 : index
    %c0_41 = arith.constant 0 : index
    %49 = vector.load %arg8[%c0_40, %c0_41] : memref<8x128xf32, #tpu.memory_space<vmem>>, vector<8x128xf32>
    tpu.vector_store %arg8[%c0_40, %c0_41], %48 {strides = array<i32>} : memref<8x128xf32, #tpu.memory_space<vmem>>, vector<8x128xf32>,
    return
  }
  func.func @transform_0(%arg0: i32) -> (i32, i32) {
    %c0_i32 = arith.constant 0 : i32
    %c0_i32_0 = arith.constant 0 : i32
    return %arg0, %c0_i32 : i32, i32
  }
  func.func @transform_1(%arg0: i32) -> (i32, i32) {
    %c0_i32 = arith.constant 0 : i32
    %c0_i32_0 = arith.constant 0 : i32
    %c0_i32_1 = arith.constant 0 : i32
    return %c0_i32, %c0_i32_0 : i32, i32
  }
  func.func @transform_2(%arg0: i32) -> (i32, i32) {
    %c0_i32 = arith.constant 0 : i32
    %c0_i32_0 = arith.constant 0 : i32
    %c0_i32_1 = arith.constant 0 : i32
    return %c0_i32, %c0_i32_0 : i32, i32
  }
  func.func @transform_3(%arg0: i32) -> (i32, i32, i32) {
    %c0_i32 = arith.constant 0 : i32
    %c0_i32_0 = arith.constant 0 : i32
    %c0_i32_1 = arith.constant 0 : i32
    %c0_i32_2 = arith.constant 0 : i32
    return %c0_i32, %c0_i32_0, %c0_i32_1 : i32, i32, i32
  }
  func.func @transform_4(%arg0: i32) -> (i32, i32, i32) {
    %c0_i32 = arith.constant 0 : i32
    %c0_i32_0 = arith.constant 0 : i32
    %c0_i32_1 = arith.constant 0 : i32
    %c0_i32_2 = arith.constant 0 : i32
    return %c0_i32, %c0_i32_0, %c0_i32_1 : i32, i32, i32
  }
  func.func @transform_5(%arg0: i32) -> (i32, i32) {
    %c0_i32 = arith.constant 0 : i32
    %c0_i32_0 = arith.constant 0 : i32
    %c0_i32_1 = arith.constant 0 : i32
    return %c0_i32, %c0_i32_0 : i32, i32
  }
  func.func @transform_6(%arg0: i32) -> (i32, i32) {
    %c0_i32 = arith.constant 0 : i32
    %c0_i32_0 = arith.constant 0 : i32
    %c0_i32_1 = arith.constant 0 : i32
    return %c0_i32, %c0_i32_0 : i32, i32
  }
  func.func @transform_7(%arg0: i32) -> (i32, i32) {
    %c0_i32 = arith.constant 0 : i32
    %c0_i32_0 = arith.constant 0 : i32
    return %arg0, %c0_i32 : i32, i32
  }
}

</mosaic_0001>

<llo_original>
// kernel: tpu_custom_call.1
$region0: #{tpu_custom_call.1}
  #allocation0 [shape = 'u32[]', space=smem, size = 0x4, offset = 0x4, fixed_abs, tag = 'smem constant byte address 0x4 - core index']
  #allocation1 [shape = 'u32[72,128]{1,0:T(1,128)}', space=vmem, size = 0x9000, scoped, tag = 'internal scratch']
  %s0 = inlined_call_operand.hbm [shape: f32[8,128], index: 0, kind: input, shape index: {}]
  %s1 = inlined_call_operand.hbm [shape: f32[128,128], index: 1, kind: input, shape index: {}]
  %s2 = inlined_call_operand.vmem [shape: f32[1,128], index: 2, kind: input, shape index: {}]
  %s3 = inlined_call_operand.hbm [shape: f32[4,128,128], index: 3, kind: input, shape index: {}]
  %s4 = inlined_call_operand.hbm [shape: f32[4,1,128], index: 4, kind: input, shape index: {}]
  %s5 = inlined_call_operand.hbm [shape: f32[128,128], index: 5, kind: input, shape index: {}]
  %s6 = inlined_call_operand.vmem [shape: f32[1,128], index: 6, kind: input, shape index: {}]
  %s7 = inlined_call_operand.hbm [shape: f32[8,128], index: 7, kind: output, shape index: {}]
  %s8 = sld [smem:[#allocation0]]
  $region58: #{tpu_custom_call.1} parent=0
    _
  %s10 = ssub.s32 1, %s8
  %s11 = scalar_select 0, %s10, %s8
  $region1: #{tpu_custom_call.1} parent=0
    #allocation2 [shape = 'u8[4096]{0}', space=vmem, size = 0x1000, scoped, tag = 'input window, operand 0, single buffered']
    #allocation3 [shape = 's32[1]{0}', space=sflag, size = 0x4, scoped, tag = 'scoped memory for tpu_custom_call.1']
    #allocation4 [shape = 's32[1]{0}', space=sflag, size = 0x4, scoped, tag = 'scoped memory for tpu_custom_call.1']
    #allocation5 [shape = 'u8[65536]{0}', space=vmem, size = 0x10000, scoped, tag = 'input window, operand 1, single buffered']
    #allocation6 [shape = 's32[1]{0}', space=sflag, size = 0x4, scoped, tag = 'scoped memory for tpu_custom_call.1']
    #allocation7 [shape = 'u8[262144]{0}', space=vmem, size = 0x40000, scoped, tag = 'input window, operand 3, single buffered']
    #allocation8 [shape = 'u8[2048]{0}', space=vmem, size = 0x800, scoped, tag = 'input window, operand 4, single buffered']
    #allocation9 [shape = 's32[1]{0}', space=sflag, size = 0x4, scoped, tag = 'scoped memory for tpu_custom_call.1']
    #allocation10 [shape = 'u8[65536]{0}', space=vmem, size = 0x10000, scoped, tag = 'input window, operand 5, single buffered']
    #allocation11 [shape = 'u8[4096]{0}', space=vmem, size = 0x1000, scoped, tag = 'output window, operand 0, single buffered']
    %12 = vsyncpa [#allocation3], 0
    %13 = vsyncpa [#allocation6], 0
    %14 = vsyncpa [#allocation9], 0
    %15 = vsyncpa [#allocation4], 0
    // Predicated region
    $region2: #{tpu_custom_call.1} parent=1 // pred_check
      _
    $region3: #{tpu_custom_call.1} parent=1 // pred_check_branch
      %17 = sbr.rel (0) target = $region5
    $region4: #{tpu_custom_call.1} parent=1 // pred_region
      %19 = vsyncadd [#allocation3], 0
      %s21 = sshll.u32 %s0, 4
      %s22 = int_to_ptr.hbm [resolvable:$true] %s21
      %s23 = sshll.u32 [#allocation2], 4
      %s24 = int_to_ptr.vmem [resolvable:$true] %s23
      %26 = dma.hbm_to_vmem [thread:$0]  %s22, 128, %s24, [#allocation3]
    $region5: #{tpu_custom_call.1} parent=1 // pred_fallthru
      _
    // Predicated region
    $region6: #{tpu_custom_call.1} parent=1 // pred_check
      _
    $region7: #{tpu_custom_call.1} parent=1 // pred_check_branch
      %28 = sbr.rel (0) target = $region9
    $region8: #{tpu_custom_call.1} parent=1 // pred_region
      %30 = vsyncadd [#allocation6], 0
      %s31 = sshll.u32 %s1, 4
      %s32 = int_to_ptr.hbm [resolvable:$true] %s31
      %s33 = sshll.u32 [#allocation5], 4
      %s34 = int_to_ptr.vmem [resolvable:$true] %s33
      %39 = dma.hbm_to_vmem [thread:$0]  %s32, 2048, %s34, [#allocation6], 128, 128, 8
    $region9: #{tpu_custom_call.1} parent=1 // pred_fallthru
      _
    // Predicated region
    $region10: #{tpu_custom_call.1} parent=1 // pred_check
      _
    $region11: #{tpu_custom_call.1} parent=1 // pred_check_branch
      %41 = sbr.rel (0) target = $region13
    $region12: #{tpu_custom_call.1} parent=1 // pred_region
      _
    $region13: #{tpu_custom_call.1} parent=1 // pred_fallthru
      _
    // Predicated region
    $region14: #{tpu_custom_call.1} parent=1 // pred_check
      _
    $region15: #{tpu_custom_call.1} parent=1 // pred_check_branch
      %43 = sbr.rel (0) target = $region17
    $region16: #{tpu_custom_call.1} parent=1 // pred_region
      %45 = vsyncadd [#allocation6], 0
      %s46 = sshll.u32 %s3, 4
      %s47 = int_to_ptr.hbm [resolvable:$true] %s46
      %s48 = sshll.u32 [#allocation7], 4
      %s49 = int_to_ptr.vmem [resolvable:$true] %s48
      %54 = dma.hbm_to_vmem [thread:$0]  %s47, 8192, %s49, [#allocation6], 128, 128, 8
    $region17: #{tpu_custom_call.1} parent=1 // pred_fallthru
      _
    // Predicated region
    $region18: #{tpu_custom_call.1} parent=1 // pred_check
      _
    $region19: #{tpu_custom_call.1} parent=1 // pred_check_branch
      %56 = sbr.rel (0) target = $region21
    $region20: #{tpu_custom_call.1} parent=1 // pred_region
      %58 = vsyncadd [#allocation9], 0
      %s59 = sshll.u32 %s4, 4
      %s60 = int_to_ptr.hbm [resolvable:$true] %s59
      %s61 = sshll.u32 [#allocation8], 4
      %s62 = int_to_ptr.vmem [resolvable:$true] %s61
      %67 = dma.hbm_to_vmem [thread:$0]  %s60, 64, %s62, [#allocation9], 16, 16, 1
    $region21: #{tpu_custom_call.1} parent=1 // pred_fallthru
      _
    // Predicated region
    $region22: #{tpu_custom_call.1} parent=1 // pred_check
      _
    $region23: #{tpu_custom_call.1} parent=1 // pred_check_branch
      %69 = sbr.rel (0) target = $region25
    $region24: #{tpu_custom_call.1} parent=1 // pred_region
      %71 = vsyncadd [#allocation9], 0
      %s72 = sshll.u32 %s5, 4
      %s73 = int_to_ptr.hbm [resolvable:$true] %s72
      %s74 = sshll.u32 [#allocation10], 4
      %s75 = int_to_ptr.vmem [resolvable:$true] %s74
      %80 = dma.hbm_to_vmem [thread:$0]  %s73, 2048, %s75, [#allocation9], 128, 128, 8
    $region25: #{tpu_custom_call.1} parent=1 // pred_fallthru
      _
    // Predicated region
    $region26: #{tpu_custom_call.1} parent=1 // pred_check
      _
    $region27: #{tpu_custom_call.1} parent=1 // pred_check_branch
      %82 = sbr.rel (0) target = $region29
    $region28: #{tpu_custom_call.1} parent=1 // pred_region
      _
    $region29: #{tpu_custom_call.1} parent=1 // pred_fallthru
      _
    // Predicated region
    $region30: #{tpu_custom_call.1} parent=1 // pred_check
      _
    $region31: #{tpu_custom_call.1} parent=1 // pred_check_branch
      %84 = sbr.rel (0) target = $region33
    $region32: #{tpu_custom_call.1} parent=1 // pred_region
      %86 = dma.done [#allocation3], 128
    $region33: #{tpu_custom_call.1} parent=1 // pred_fallthru
      _
    // Predicated region
    $region34: #{tpu_custom_call.1} parent=1 // pred_check
      _
    $region35: #{tpu_custom_call.1} parent=1 // pred_check_branch
      %88 = sbr.rel (0) target = $region37
    $region36: #{tpu_custom_call.1} parent=1 // pred_region
      %90 = dma.done [#allocation6], 2048
    $region37: #{tpu_custom_call.1} parent=1 // pred_fallthru
      _
    // Predicated region
    $region38: #{tpu_custom_call.1} parent=1 // pred_check
      _
    $region39: #{tpu_custom_call.1} parent=1 // pred_check_branch
      %92 = sbr.rel (0) target = $region41
    $region40: #{tpu_custom_call.1} parent=1 // pred_region
      %94 = dma.done [#allocation6], 8192
    $region41: #{tpu_custom_call.1} parent=1 // pred_fallthru
      _
    // Predicated region
    $region42: #{tpu_custom_call.1} parent=1 // pred_check
      _
    $region43: #{tpu_custom_call.1} parent=1 // pred_check_branch
      %96 = sbr.rel (0) target = $region45
    $region44: #{tpu_custom_call.1} parent=1 // pred_region
      %98 = dma.done [#allocation9], 64
    $region45: #{tpu_custom_call.1} parent=1 // pred_fallthru
      _
    // Predicated region
    $region46: #{tpu_custom_call.1} parent=1 // pred_check
      _
    $region47: #{tpu_custom_call.1} parent=1 // pred_check_branch
      %100 = sbr.rel (0) target = $region49
    $region48: #{tpu_custom_call.1} parent=1 // pred_region
      %102 = dma.done [#allocation9], 2048
    $region49: #{tpu_custom_call.1} parent=1 // pred_fallthru
      _
    %v103 = vld [vmem:[#allocation2] sm:$0xff]
    %v104 = vld [vmem:[#allocation5] sm:$0xff]
    %v105 = vld [vmem:[#allocation5 + $0x8] sm:$0xff]
    %v106 = vld [vmem:[#allocation5 + $0x10] sm:$0xff]
    %v107 = vld [vmem:[#allocation5 + $0x18] sm:$0xff]
    %v108 = vld [vmem:[#allocation5 + $0x20] sm:$0xff]
    %v109 = vld [vmem:[#allocation5 + $0x28] sm:$0xff]
    %v110 = vld [vmem:[#allocation5 + $0x30] sm:$0xff]
    %v111 = vld [vmem:[#allocation5 + $0x38] sm:$0xff]
    %v112 = vld [vmem:[#allocation5 + $0x40] sm:$0xff]
    %v113 = vld [vmem:[#allocation5 + $0x48] sm:$0xff]
    %v114 = vld [vmem:[#allocation5 + $0x50] sm:$0xff]
    %v115 = vld [vmem:[#allocation5 + $0x58] sm:$0xff]
    %v116 = vld [vmem:[#allocation5 + $0x60] sm:$0xff]
    %v117 = vld [vmem:[#allocation5 + $0x68] sm:$0xff]
    %v118 = vld [vmem:[#allocation5 + $0x70] sm:$0xff]
    %v119 = vld [vmem:[#allocation5 + $0x78] sm:$0xff]
    %v120 = vld [vmem:[%s2] sm:$0x1]
    %v122 = vperm.slane %v120, 0
    %124 = vmatpush.msra.mxu0 %v119
    %125 = vmatpush.msra.mxu0 %v118
    %126 = vmatpush.msra.mxu0 %v117
    %127 = vmatpush.msra.mxu0 %v116
    %128 = vmatpush.msra.mxu0 %v115
    %129 = vmatpush.msra.mxu0 %v114
    %130 = vmatpush.msra.mxu0 %v113
    %131 = vmatpush.msra.mxu0 %v112
    %132 = vmatpush.msra.mxu0 %v111
    %133 = vmatpush.msra.mxu0 %v110
    %134 = vmatpush.msra.mxu0 %v109
    %135 = vmatpush.msra.mxu0 %v108
    %136 = vmatpush.msra.mxu0 %v107
    %137 = vmatpush.msra.mxu0 %v106
    %138 = vmatpush.msra.mxu0 %v105
    %139 = vmatpush.msra.mxu0 %v104
    %140 = vmatmul.f32.gmra.mxu0 %v103
    %v141 = vpop.f32.mrf.mxu0
    %v142 = vadd.f32 %v122, %v141
    %143 = vdwg.mxu0
    %v144 = vmax.f32 %v142, 0.0
    %v145 = vld [vmem:[#allocation7] sm:$0xff]
    %v146 = vld [vmem:[#allocation7 + $0x8] sm:$0xff]
    %v147 = vld [vmem:[#allocation7 + $0x10] sm:$0xff]
    %v148 = vld [vmem:[#allocation7 + $0x18] sm:$0xff]
    %v149 = vld [vmem:[#allocation7 + $0x20] sm:$0xff]
    %v150 = vld [vmem:[#allocation7 + $0x28] sm:$0xff]
    %v151 = vld [vmem:[#allocation7 + $0x30] sm:$0xff]
    %v152 = vld [vmem:[#allocation7 + $0x38] sm:$0xff]
    %v153 = vld [vmem:[#allocation7 + $0x40] sm:$0xff]
    %v154 = vld [vmem:[#allocation7 + $0x48] sm:$0xff]
    %v155 = vld [vmem:[#allocation7 + $0x50] sm:$0xff]
    %v156 = vld [vmem:[#allocation7 + $0x58] sm:$0xff]
    %v157 = vld [vmem:[#allocation7 + $0x60] sm:$0xff]
    %v158 = vld [vmem:[#allocation7 + $0x68] sm:$0xff]
    %v159 = vld [vmem:[#allocation7 + $0x70] sm:$0xff]
    %v160 = vld [vmem:[#allocation7 + $0x78] sm:$0xff]
    %v161 = vld [vmem:[#allocation8] sm:$0x1]
    %v163 = vperm.slane %v161, 0
    %165 = vmatpush.msra.mxu0 %v160
    %166 = vmatpush.msra.mxu0 %v159
    %167 = vmatpush.msra.mxu0 %v158
    %168 = vmatpush.msra.mxu0 %v157
    %169 = vmatpush.msra.mxu0 %v156
    %170 = vmatpush.msra.mxu0 %v155
    %171 = vmatpush.msra.mxu0 %v154
    %172 = vmatpush.msra.mxu0 %v153
    %173 = vmatpush.msra.mxu0 %v152
    %174 = vmatpush.msra.mxu0 %v151
    %175 = vmatpush.msra.mxu0 %v150
    %176 = vmatpush.msra.mxu0 %v149
    %177 = vmatpush.msra.mxu0 %v148
    %178 = vmatpush.msra.mxu0 %v147
    %179 = vmatpush.msra.mxu0 %v146
    %180 = vmatpush.msra.mxu0 %v145
    %181 = vmatmul.f32.gmra.mxu0 %v144
    %v182 = vpop.f32.mrf.mxu0
    %v183 = vadd.f32 %v163, %v182
    %184 = vdwg.mxu0
    %v185 = vmax.f32 %v183, 0.0
    %s186 = scalar_lea.vmem [#allocation7], 128
    %v187 = vld [vmem:[%s186] sm:$0xff]
    %v188 = vld [vmem:[%s186 + $0x8] sm:$0xff]
    %v189 = vld [vmem:[%s186 + $0x10] sm:$0xff]
    %v190 = vld [vmem:[%s186 + $0x18] sm:$0xff]
    %v191 = vld [vmem:[%s186 + $0x20] sm:$0xff]
    %v192 = vld [vmem:[%s186 + $0x28] sm:$0xff]
    %v193 = vld [vmem:[%s186 + $0x30] sm:$0xff]
    %v194 = vld [vmem:[%s186 + $0x38] sm:$0xff]
    %v195 = vld [vmem:[%s186 + $0x40] sm:$0xff]
    %v196 = vld [vmem:[%s186 + $0x48] sm:$0xff]
    %v197 = vld [vmem:[%s186 + $0x50] sm:$0xff]
    %v198 = vld [vmem:[%s186 + $0x58] sm:$0xff]
    %v199 = vld [vmem:[%s186 + $0x60] sm:$0xff]
    %v200 = vld [vmem:[%s186 + $0x68] sm:$0xff]
    %v201 = vld [vmem:[%s186 + $0x70] sm:$0xff]
    %v202 = vld [vmem:[%s186 + $0x78] sm:$0xff]
    %s203 = scalar_lea.vmem [#allocation8], 1
    %v204 = vld [vmem:[%s203] sm:$0x1]
    %v206 = vperm.slane %v204, 0
    %208 = vmatpush.msra.mxu0 %v202
    %209 = vmatpush.msra.mxu0 %v201
    %210 = vmatpush.msra.mxu0 %v200
    %211 = vmatpush.msra.mxu0 %v199
    %212 = vmatpush.msra.mxu0 %v198
    %213 = vmatpush.msra.mxu0 %v197
    %214 = vmatpush.msra.mxu0 %v196
    %215 = vmatpush.msra.mxu0 %v195
    %216 = vmatpush.msra.mxu0 %v194
    %217 = vmatpush.msra.mxu0 %v193
    %218 = vmatpush.msra.mxu0 %v192
    %219 = vmatpush.msra.mxu0 %v191
    %220 = vmatpush.msra.mxu0 %v190
    %221 = vmatpush.msra.mxu0 %v189
    %222 = vmatpush.msra.mxu0 %v188
    %223 = vmatpush.msra.mxu0 %v187
    %224 = vmatmul.f32.gmra.mxu0 %v185
    %v225 = vpop.f32.mrf.mxu0
    %v226 = vadd.f32 %v206, %v225
    %227 = vdwg.mxu0
    %v228 = vmax.f32 %v226, 0.0
    %s229 = scalar_lea.vmem [#allocation7], 256
    %v230 = vld [vmem:[%s229] sm:$0xff]
    %v231 = vld [vmem:[%s229 + $0x8] sm:$0xff]
    %v232 = vld [vmem:[%s229 + $0x10] sm:$0xff]
    %v233 = vld [vmem:[%s229 + $0x18] sm:$0xff]
    %v234 = vld [vmem:[%s229 + $0x20] sm:$0xff]
    %v235 = vld [vmem:[%s229 + $0x28] sm:$0xff]
    %v236 = vld [vmem:[%s229 + $0x30] sm:$0xff]
    %v237 = vld [vmem:[%s229 + $0x38] sm:$0xff]
    %v238 = vld [vmem:[%s229 + $0x40] sm:$0xff]
    %v239 = vld [vmem:[%s229 + $0x48] sm:$0xff]
    %v240 = vld [vmem:[%s229 + $0x50] sm:$0xff]
    %v241 = vld [vmem:[%s229 + $0x58] sm:$0xff]
    %v242 = vld [vmem:[%s229 + $0x60] sm:$0xff]
    %v243 = vld [vmem:[%s229 + $0x68] sm:$0xff]
    %v244 = vld [vmem:[%s229 + $0x70] sm:$0xff]
    %v245 = vld [vmem:[%s229 + $0x78] sm:$0xff]
    %s246 = scalar_lea.vmem [#allocation8], 2
    %v247 = vld [vmem:[%s246] sm:$0x1]
    %v249 = vperm.slane %v247, 0
    %251 = vmatpush.msra.mxu0 %v245
    %252 = vmatpush.msra.mxu0 %v244
    %253 = vmatpush.msra.mxu0 %v243
    %254 = vmatpush.msra.mxu0 %v242
    %255 = vmatpush.msra.mxu0 %v241
    %256 = vmatpush.msra.mxu0 %v240
    %257 = vmatpush.msra.mxu0 %v239
    %258 = vmatpush.msra.mxu0 %v238
    %259 = vmatpush.msra.mxu0 %v237
    %260 = vmatpush.msra.mxu0 %v236
    %261 = vmatpush.msra.mxu0 %v235
    %262 = vmatpush.msra.mxu0 %v234
    %263 = vmatpush.msra.mxu0 %v233
    %264 = vmatpush.msra.mxu0 %v232
    %265 = vmatpush.msra.mxu0 %v231
    %266 = vmatpush.msra.mxu0 %v230
    %267 = vmatmul.f32.gmra.mxu0 %v228
    %v268 = vpop.f32.mrf.mxu0
    %v269 = vadd.f32 %v249, %v268
    %270 = vdwg.mxu0
    %v271 = vmax.f32 %v269, 0.0
    %s272 = scalar_lea.vmem [#allocation7], 384
    %v273 = vld [vmem:[%s272] sm:$0xff]
    %v274 = vld [vmem:[%s272 + $0x8] sm:$0xff]
    %v275 = vld [vmem:[%s272 + $0x10] sm:$0xff]
    %v276 = vld [vmem:[%s272 + $0x18] sm:$0xff]
    %v277 = vld [vmem:[%s272 + $0x20] sm:$0xff]
    %v278 = vld [vmem:[%s272 + $0x28] sm:$0xff]
    %v279 = vld [vmem:[%s272 + $0x30] sm:$0xff]
    %v280 = vld [vmem:[%s272 + $0x38] sm:$0xff]
    %v281 = vld [vmem:[%s272 + $0x40] sm:$0xff]
    %v282 = vld [vmem:[%s272 + $0x48] sm:$0xff]
    %v283 = vld [vmem:[%s272 + $0x50] sm:$0xff]
    %v284 = vld [vmem:[%s272 + $0x58] sm:$0xff]
    %v285 = vld [vmem:[%s272 + $0x60] sm:$0xff]
    %v286 = vld [vmem:[%s272 + $0x68] sm:$0xff]
    %v287 = vld [vmem:[%s272 + $0x70] sm:$0xff]
    %v288 = vld [vmem:[%s272 + $0x78] sm:$0xff]
    %s289 = scalar_lea.vmem [#allocation8], 3
    %v290 = vld [vmem:[%s289] sm:$0x1]
    %v292 = vperm.slane %v290, 0
    %294 = vmatpush.msra.mxu0 %v288
    %295 = vmatpush.msra.mxu0 %v287
    %296 = vmatpush.msra.mxu0 %v286
    %297 = vmatpush.msra.mxu0 %v285
    %298 = vmatpush.msra.mxu0 %v284
    %299 = vmatpush.msra.mxu0 %v283
    %300 = vmatpush.msra.mxu0 %v282
    %301 = vmatpush.msra.mxu0 %v281
    %302 = vmatpush.msra.mxu0 %v280
    %303 = vmatpush.msra.mxu0 %v279
    %304 = vmatpush.msra.mxu0 %v278
    %305 = vmatpush.msra.mxu0 %v277
    %306 = vmatpush.msra.mxu0 %v276
    %307 = vmatpush.msra.mxu0 %v275
    %308 = vmatpush.msra.mxu0 %v274
    %309 = vmatpush.msra.mxu0 %v273
    %310 = vmatmul.f32.gmra.mxu0 %v271
    %v311 = vpop.f32.mrf.mxu0
    %v312 = vadd.f32 %v292, %v311
    %313 = vdwg.mxu0
    %v314 = vmax.f32 %v312, 0.0
    %v315 = vld [vmem:[#allocation10] sm:$0xff]
    %v316 = vld [vmem:[#allocation10 + $0x8] sm:$0xff]
    %v317 = vld [vmem:[#allocation10 + $0x10] sm:$0xff]
    %v318 = vld [vmem:[#allocation10 + $0x18] sm:$0xff]
    %v319 = vld [vmem:[#allocation10 + $0x20] sm:$0xff]
    %v320 = vld [vmem:[#allocation10 + $0x28] sm:$0xff]
    %v321 = vld [vmem:[#allocation10 + $0x30] sm:$0xff]
    %v322 = vld [vmem:[#allocation10 + $0x38] sm:$0xff]
    %v323 = vld [vmem:[#allocation10 + $0x40] sm:$0xff]
    %v324 = vld [vmem:[#allocation10 + $0x48] sm:$0xff]
    %v325 = vld [vmem:[#allocation10 + $0x50] sm:$0xff]
    %v326 = vld [vmem:[#allocation10 + $0x58] sm:$0xff]
    %v327 = vld [vmem:[#allocation10 + $0x60] sm:$0xff]
    %v328 = vld [vmem:[#allocation10 + $0x68] sm:$0xff]
    %v329 = vld [vmem:[#allocation10 + $0x70] sm:$0xff]
    %v330 = vld [vmem:[#allocation10 + $0x78] sm:$0xff]
    %v331 = vld [vmem:[%s6] sm:$0x1]
    %v333 = vperm.slane %v331, 0
    %335 = vmatpush.msra.mxu0 %v330
    %336 = vmatpush.msra.mxu0 %v329
    %337 = vmatpush.msra.mxu0 %v328
    %338 = vmatpush.msra.mxu0 %v327
    %339 = vmatpush.msra.mxu0 %v326
    %340 = vmatpush.msra.mxu0 %v325
    %341 = vmatpush.msra.mxu0 %v324
    %342 = vmatpush.msra.mxu0 %v323
    %343 = vmatpush.msra.mxu0 %v322
    %344 = vmatpush.msra.mxu0 %v321
    %345 = vmatpush.msra.mxu0 %v320
    %346 = vmatpush.msra.mxu0 %v319
    %347 = vmatpush.msra.mxu0 %v318
    %348 = vmatpush.msra.mxu0 %v317
    %349 = vmatpush.msra.mxu0 %v316
    %350 = vmatpush.msra.mxu0 %v315
    %351 = vmatmul.f32.gmra.mxu0 %v314
    %v352 = vpop.f32.mrf.mxu0
    %v353 = vadd.f32 %v333, %v352
    %354 = vdwg.mxu0
    %355 = vst [vmem:[#allocation11] sm:$0xff] %v353
    // Predicated region
    $region50: #{tpu_custom_call.1} parent=1 // pred_check
      _
    $region51: #{tpu_custom_call.1} parent=1 // pred_check_branch
      %357 = sbr.rel (0) target = $region53
    $region52: #{tpu_custom_call.1} parent=1 // pred_region
      %359 = vsyncadd [#allocation4], 0
      %s361 = sshll.u32 [#allocation11], 4
      %s362 = int_to_ptr.vmem [resolvable:$true] %s361
      %s363 = sshll.u32 %s7, 4
      %s364 = int_to_ptr.hbm [resolvable:$true] %s363
      %366 = dma.vmem_to_hbm [thread:$0]  %s362, 128, %s364, [#allocation4]
    $region53: #{tpu_custom_call.1} parent=1 // pred_fallthru
      _
    // Predicated region
    $region54: #{tpu_custom_call.1} parent=1 // pred_check
      _
    $region55: #{tpu_custom_call.1} parent=1 // pred_check_branch
      %368 = sbr.rel (0) target = $region57
    $region56: #{tpu_custom_call.1} parent=1 // pred_region
      %370 = dma.done [#allocation4], 128
    $region57: #{tpu_custom_call.1} parent=1 // pred_fallthru
      _
    %371 = vsyncpa [#allocation3], 1
    %372 = vsyncpa [#allocation6], 1
    %373 = vsyncpa [#allocation9], 1
    %374 = vsyncpa [#allocation4], 1

</llo_original>
